<compile_context>
chip_gen: v5e
topology: v5e:2x2
jax: 0.10.0
libtpu: 0.0.40
codegen_flags: <defaults>
</compile_context>

<pallas_src>
import jax
import jax.numpy as jnp
from jax import lax
from jax.experimental import pallas as pl
from jax.experimental.pallas import tpu as pltpu

_LANE = 128
_SUBLANE = 8


def _quadratic_kernel(x_ref, a_ref, o_ref):
    # x_ref: (Nb, S, T) block of Nb batches
    # a_ref: (T, T) pre-folded A_eff (shared across all grid steps)
    # o_ref: (Nb, S, S) output block
    nb, s, t = x_ref.shape
    x = x_ref[...]                                    # (Nb, S, T)
    a = a_ref[...]                                    # (T, T)

    if s % _SUBLANE == 0:
        # Layout-preserving major-dim merge (S is a multiple of the 8-row
        # sublane tile, so no hidden VMEM relayout): one 2-D (Nb*S, T) @ (T, T)
        # fills MXU rows across the whole batch block.
        x2d = x.reshape(nb * s, t)
        r1 = jnp.dot(x2d, a, preferred_element_type=jnp.float32).reshape(nb, s, t)
    else:
        # S not sublane-aligned: avoid the relayout-inducing reshape and use a
        # batched matmul with a (replicated-layout) broadcast of A instead.
        a_b = jnp.broadcast_to(a, (nb, t, t))
        r1 = lax.dot_general(
            x, a_b,
            dimension_numbers=(((2,), (1,)), ((0,), (0,))),
            preferred_element_type=jnp.float32,
        )

    # Second matmul: contract the LAST dims of both operands via dot_general,
    # batched over Nb — avoids materializing an explicit XLU transpose of x.
    out = lax.dot_general(
        r1, x,
        dimension_numbers=(((2,), (2,)), ((0,), (0,))),
        preferred_element_type=jnp.float32,
    )                                                 # (Nb, S, S)

    # TODO(synk): lane-dense output repack ((Nb,S,S) -> (1, Nb*S*S)) deferred;
    # the minor-dims reshape is not guaranteed to lower in Mosaic and the write
    # stream is a small fraction of traffic at these shapes.
    o_ref[...] = out.astype(o_ref.dtype)


def _round_up(v, m):
    return ((v + m - 1) // m) * m


def _padded_tile_bytes(major, s, t, itemsize=4):
    """VMEM bytes of an f32 tile (major, s, t) after (8,128) tile padding of
    the last two dims."""
    return major * _round_up(max(s, 1), _SUBLANE) * _round_up(max(t, 1), _LANE) * itemsize


def _vmem_policy():
    """(block_budget_bytes, vmem_limit_bytes), generation-aware.

    v7x-class (<= 64 MiB VMEM per core): keep padded, double-buffered blocks
    ~<= 24 MiB and a 32 MiB scoped limit.  v5e/v6e (128 MiB physical): allow
    ~48 MiB of blocks and raise the scoped limit to 64 MiB (v5e's default
    scoped limit is only 16 MiB, so it must be set explicitly).
    """
    phys = None
    try:
        info = pltpu.get_tpu_info()
        phys = getattr(info, "vmem_capacity_bytes", None)
    except Exception:
        phys = None
    if phys is None or int(phys) <= 64 * 1024 * 1024:
        return 24 * 1024 * 1024, 32 * 1024 * 1024      # conservative / v7x-class
    return 48 * 1024 * 1024, 64 * 1024 * 1024          # v5e / v6e class


def _pick_nb(N, S, T, block_budget_bytes):
    """Largest divisor of N such that the padded, double-buffered blocks plus
    live intermediates fit the budget, stopping once the padded x block reaches
    ~2 MiB (enough HBM bytes per grid step to amortize the ~0.35 us step
    overhead).  nb is capped at N//2 so the grid always has >= 2 steps and both
    v7x TensorCores get work (costless on 1-TC v5e/v6e).
    """
    # nb must divide N; for prime/awkward N this degrades to nb=1 (correct but
    # slow).  TODO(synk): pad N or use a cdiv grid with masking for such N.
    max_nb = N if N < 2 else max(1, N // 2)
    best = 1
    for nb in range(1, max_nb + 1):
        if N % nb:
            continue
        x_blk = _padded_tile_bytes(nb, S, T)            # x block, per buffer
        o_blk = _padded_tile_bytes(nb, S, S)            # out block, per buffer
        a_blk = _padded_tile_bytes(1, T, T)             # folded A, per buffer
        live = _padded_tile_bytes(nb, S, T) + _padded_tile_bytes(nb, S, S)  # r1 + f32 out
        total = 2 * (x_blk + o_blk + a_blk) + live      # double-buffered blocks + live values
        if total > block_budget_bytes:
            break
        best = nb
        if x_blk >= 2 * 1024 * 1024:                    # ~1-4 MiB padded x block target
            break
    return best


def quadratic_forward(x, weight, A, *, nb=None):
    """x: (N, S, T) f32, weight: (T,) f32, A: (T, T) f32 -> (N, S, S) f32."""
    N, S, T = x.shape

    # Fold weight and the normalization into A (divide by sum of the ORIGINAL A).
    a_eff = ((weight[:, None] * A * weight[None, :]) / jnp.sum(A)).astype(jnp.float32)

    block_budget, vmem_limit = _vmem_policy()
    if nb is None:
        nb = _pick_nb(N, S, T, block_budget)
    assert N % nb == 0, "nb must divide the batch dimension"

    return pl.pallas_call(
        _quadratic_kernel,
        out_shape=jax.ShapeDtypeStruct((N, S, S), jnp.float32),
        grid_spec=pltpu.PrefetchScalarGridSpec(
            num_scalar_prefetch=0,
            grid=(N // nb,),
            in_specs=[
                pl.BlockSpec((nb, S, T), lambda b: (b, 0, 0)),  # Nb batches of x
                pl.BlockSpec((T, T), lambda b: (0, 0)),         # folded A (shared)
            ],
            out_specs=pl.BlockSpec((nb, S, S), lambda b: (b, 0, 0)),
        ),
        compiler_params=pltpu.CompilerParams(
            dimension_semantics=("parallel",),   # batch axis -> megacore sharding
            vmem_limit_bytes=vmem_limit,
        ),
    )(x, a_eff)


if __name__ == "__main__":
    # Module parameters: input_shape = (n, m) = (S, T) = (8, 32), eps = 0.1.
    # N = 64 keeps things small while exercising a multi-step grid (nb=32, grid=(2,)).
    N, S, T = 64, 8, 32
    eps = 0.1

    key = jax.random.PRNGKey(0)
    k_a, k_x = jax.random.split(key)

    # Deterministic parameter init mirroring __init__:
    #   weight = ones(m); A = eye(m) + eps * randn(m, m)
    weight = jnp.ones((T,), dtype=jnp.float32)
    A = jnp.eye(T, dtype=jnp.float32) + eps * jax.random.normal(
        k_a, (T, T), dtype=jnp.float32
    )
    x = jax.random.normal(k_x, (N, S, T), dtype=jnp.float32)

    fwd = jax.jit(quadratic_forward)
    out = jax.block_until_ready(fwd(x, weight, A))

    # Pure-JAX reference (matches the PyTorch forward exactly)
    xw = x * weight[None, None, :]
    ref = jnp.matmul(jnp.matmul(xw, A), jnp.swapaxes(xw, 1, 2)) / jnp.sum(A)

    assert out.shape == (N, S, S)
    assert jnp.allclose(out, ref, atol=1e-3, rtol=1e-4), float(
        jnp.max(jnp.abs(out - ref))
    )

    print("KERNEL_OK")
</pallas_src>

<mosaic_0001>
module attributes {stable_mosaic.version = 11 : i64} {
  func.func @_quadratic_kernel(%arg0: i32, %arg1: memref<32x8x32xf32, #tpu.memory_space<vmem>>, %arg2: memref<32x32xf32, #tpu.memory_space<vmem>>, %arg3: memref<32x8x8xf32, #tpu.memory_space<vmem>>) attributes {dimension_semantics = [#tpu.dimension_semantics<parallel>], iteration_bounds = array<i64: 2>, scalar_prefetch = 0 : i64, scratch_operands = 0 : i64, tpu.core_type = #tpu.core_type<tc>, window_params = [{transform_indices = @transform_0, window_bounds = array<i64: 32, 8, 32>}, {pipeline_mode = #tpu.pipeline_mode<synchronous>, transform_indices = @transform_1, window_bounds = array<i64: 32, 32>}, {transform_indices = @transform_2, window_bounds = array<i64: 32, 8, 8>}]} {
    %c0 = arith.constant 0 : index
    %c0_0 = arith.constant 0 : index
    %c0_1 = arith.constant 0 : index
    %0 = vector.load %arg1[%c0, %c0_0, %c0_1] : memref<32x8x32xf32, #tpu.memory_space<vmem>>, vector<32x8x32xf32>
    %c0_2 = arith.constant 0 : index
    %c0_3 = arith.constant 0 : index
    %1 = vector.load %arg2[%c0_2, %c0_3] : memref<32x32xf32, #tpu.memory_space<vmem>>, vector<32x32xf32>
    %2 = vector.shape_cast %0 : vector<32x8x32xf32> to vector<256x32xf32>
    %cst = arith.constant dense<0.000000e+00> : vector<256x32xf32>
    %3 = tpu.matmul %2, %1, %cst {dimension_numbers = #tpu.dot_dimension_numbers<[1], [0], [0], [1], [0, 0, 1, 1], [], []>} : vector<256x32xf32>, vector<32x32xf32>, vector<256x32xf32> -> vector<256x32xf32>
    %4 = vector.shape_cast %3 : vector<256x32xf32> to vector<32x8x32xf32>
    %cst_4 = arith.constant dense<0.000000e+00> : vector<32x8x8xf32>
    %5 = tpu.matmul %4, %0, %cst_4 {dimension_numbers = #tpu.dot_dimension_numbers<[2], [2], [1], [1], [0, 0, 0, 1, 1, 1], [0], [0]>} : vector<32x8x32xf32>, vector<32x8x32xf32>, vector<32x8x8xf32> -> vector<32x8x8xf32>
    %c0_5 = arith.constant 0 : index
    %c0_6 = arith.constant 0 : index
    %c0_7 = arith.constant 0 : index
    %6 = vector.load %arg3[%c0_5, %c0_6, %c0_7] : memref<32x8x8xf32, #tpu.memory_space<vmem>>, vector<32x8x8xf32>
    tpu.vector_store %arg3[%c0_5, %c0_6, %c0_7], %5 {strides = array<i32>} : memref<32x8x8xf32, #tpu.memory_space<vmem>>, vector<32x8x8xf32>,
    return
  }
  func.func @transform_0(%arg0: i32) -> (i32, i32, i32) {
    %c0_i32 = arith.constant 0 : i32
    %c0_i32_0 = arith.constant 0 : i32
    %c0_i32_1 = arith.constant 0 : i32
    return %arg0, %c0_i32, %c0_i32_0 : i32, i32, i32
  }
  func.func @transform_1(%arg0: i32) -> (i32, i32) {
    %c0_i32 = arith.constant 0 : i32
    %c0_i32_0 = arith.constant 0 : i32
    %c0_i32_1 = arith.constant 0 : i32
    return %c0_i32, %c0_i32_0 : i32, i32
  }
  func.func @transform_2(%arg0: i32) -> (i32, i32, i32) {
    %c0_i32 = arith.constant 0 : i32
    %c0_i32_0 = arith.constant 0 : i32
    %c0_i32_1 = arith.constant 0 : i32
    return %arg0, %c0_i32, %c0_i32_0 : i32, i32, i32
  }
}

</mosaic_0001>

<llo_original>
// kernel: quadratic_forward.1
$region0: #{quadratic_forward.1}
  #allocation0 [shape = 'u32[]', space=smem, size = 0x4, offset = 0x4, fixed_abs, tag = 'smem constant byte address 0x4 - core index']
  #allocation1 [shape = 'u32[72,128]{1,0:T(1,128)}', space=vmem, size = 0x9000, scoped, tag = 'internal scratch']
  %s0 = inlined_call_operand.vmem [shape: f32[64,8,32], index: 0, kind: input, shape index: {}]
  %s1 = inlined_call_operand.vmem [shape: f32[32,32], index: 1, kind: input, shape index: {}]
  %s2 = inlined_call_operand.vmem [shape: f32[64,8,8], index: 2, kind: output, shape index: {}]
  %s3 = sld [smem:[#allocation0]]
  $region41: #{quadratic_forward.1} parent=0
    _
  %s5 = ssub.s32 1, %s3
  %s6 = scalar_select 0, %s5, %s3
  loop: start=0, step=1, limit=4
  $region2: #{quadratic_forward.1} parent=0 // loop_pre_header
    _
  $region3: #{quadratic_forward.1} parent=0 // loop_header
    %s8 = sphi 0, %s12
    %p9 = scmp.ge.s32.totalorder %s8, 4
    %s18 = sphi 0, %s20
    %s21 = sphi 0, %s18
    %s22 = sphi 0, %s21
    %s38 = sphi 0, %s22
    %s42 = sphi 0, %s42
    %s44 = sphi 0, %s42
    %s45 = sphi 0, %s44
    %s59 = sphi 0, %s45
    %s65 = sphi 0, %s67
    %s68 = sphi 0, %s65
    %s69 = sphi 0, %s68
    %s85 = sphi 0, %s69
  $region4: #{quadratic_forward.1} parent=0 // loop_header_branch
    %11 = sbr.rel (%p9) target = $region8
  $region5: #{quadratic_forward.1} parent=0 // loop_body
    %s13 = ssub.s32 %s8, 1
    %s14 = ssub.s32 %s8, 2
    %s15 = sadd.s32 %s8, 1
    %s16 = ssub.s32 %s8, %s15
    %p17 = scmp.eq.s32.totalorder %s16, 0
    %s19 = sadd.s32 %s18, 1
    %s20 = scalar_select %p17, %s18, %s19
    %p23 = pneg %p17
    %p24 = scmp.eq.s32.totalorder %s8, 1
    %p25 = por %p23, %p24
    %p26 = scmp.ne.s32.totalorder %s18, %s21
    %p27 = scmp.eq.s32.totalorder %s8, 0
    %p28 = por %p26, %p27
    %p29 = scmp.ne.s32.totalorder %s18, %s21
    %p30 = scmp.eq.s32.totalorder %s13, 1
    %p31 = por %p29, %p30
    %p32 = scmp.ne.s32.totalorder %s21, %s22
    %p33 = scmp.eq.s32.totalorder %s13, 0
    %p34 = por %p32, %p33
    %p35 = scmp.ne.s32.totalorder %s21, %s22
    %p36 = scmp.eq.s32.totalorder %s14, 1
    %p37 = por %p35, %p36
    %p39 = scmp.ne.s32.totalorder %s22, %s38
    %p40 = scmp.eq.s32.totalorder %s14, 0
    %p41 = por %p39, %p40
    %s43 = sadd.s32 %s42, 1
    %p46 = scmp.eq.s32.totalorder %s8, 1
    %p47 = scmp.ne.s32.totalorder %s42, %s44
    %p48 = scmp.eq.s32.totalorder %s8, 0
    %p49 = por %p47, %p48
    %p50 = scmp.ne.s32.totalorder %s42, %s44
    %p51 = scmp.eq.s32.totalorder %s13, 1
    %p52 = por %p50, %p51
    %p53 = scmp.ne.s32.totalorder %s44, %s45
    %p54 = scmp.eq.s32.totalorder %s13, 0
    %p55 = por %p53, %p54
    %p56 = scmp.ne.s32.totalorder %s44, %s45
    %p57 = scmp.eq.s32.totalorder %s14, 1
    %p58 = por %p56, %p57
    %p60 = scmp.ne.s32.totalorder %s45, %s59
    %p61 = scmp.eq.s32.totalorder %s14, 0
    %p62 = por %p60, %p61
    %s63 = ssub.s32 %s8, %s15
    %p64 = scmp.eq.s32.totalorder %s63, 0
    %s66 = sadd.s32 %s65, 1
    %s67 = scalar_select %p64, %s65, %s66
    %p70 = pneg %p64
    %p71 = scmp.eq.s32.totalorder %s8, 1
    %p72 = por %p70, %p71
    %p73 = scmp.ne.s32.totalorder %s65, %s68
    %p74 = scmp.eq.s32.totalorder %s8, 0
    %p75 = por %p73, %p74
    %p76 = scmp.ne.s32.totalorder %s65, %s68
    %p77 = scmp.eq.s32.totalorder %s13, 1
    %p78 = por %p76, %p77
    %p79 = scmp.ne.s32.totalorder %s68, %s69
    %p80 = scmp.eq.s32.totalorder %s13, 0
    %p81 = por %p79, %p80
    %p82 = scmp.ne.s32.totalorder %s68, %s69
    %p83 = scmp.eq.s32.totalorder %s14, 1
    %p84 = por %p82, %p83
    %p86 = scmp.ne.s32.totalorder %s69, %s85
    %p87 = scmp.eq.s32.totalorder %s14, 0
    %p88 = por %p86, %p87
    %p89 = scmp.le.s32.totalorder 1, %s8
    %p90 = scmp.lt.s32.totalorder %s8, 3
    %p91 = pnand %p89, %p90
    %p92 = pneg %p91
    // Predicated region
    $region9: #{quadratic_forward.1} parent=5 // pred_check
      _
    $region10: #{quadratic_forward.1} parent=5 // pred_check_branch
      %94 = sbr.rel (%p91) target = $region12
    $region11: #{quadratic_forward.1} parent=5 // pred_region
      %s95 = ssub.s32 %s8, 1
      // Predicated region
      $region13: #{quadratic_forward.1} parent=11 // pred_check
        %p96 = pneg %p55
      $region14: #{quadratic_forward.1} parent=11 // pred_check_branch
        %98 = sbr.rel (%p96) target = $region16
      $region15: #{quadratic_forward.1} parent=11 // pred_region
        _
      $region16: #{quadratic_forward.1} parent=11 // pred_fallthru
        _
    $region12: #{quadratic_forward.1} parent=5 // pred_fallthru
      _
    %p99 = scmp.lt.s32.totalorder %s8, 2
    // Predicated region
    $region17: #{quadratic_forward.1} parent=5 // pred_check
      %p100 = pneg %p99
    $region18: #{quadratic_forward.1} parent=5 // pred_check_branch
      %102 = sbr.rel (%p100) target = $region20
    $region19: #{quadratic_forward.1} parent=5 // pred_region
      // Predicated region
      $region21: #{quadratic_forward.1} parent=19 // pred_check
        %p103 = pneg %p28
      $region22: #{quadratic_forward.1} parent=19 // pred_check_branch
        %105 = sbr.rel (%p103) target = $region24
      $region23: #{quadratic_forward.1} parent=19 // pred_region
        %s106 = smul.u32 32, %s8
        %p107 = scmp.lt.s32.totalorder %s106, 63
        %s108 = scalar_select %p107, %s106, 63
        %s109 = smul.addr %s108, 8
        %s110 = scalar_lea.vmem %s0, %s109
        %s111 = smul.u32 32, %s8
      $region24: #{quadratic_forward.1} parent=19 // pred_fallthru
        _
    $region20: #{quadratic_forward.1} parent=5 // pred_fallthru
      _
    %p112 = scmp.le.s32.totalorder 1, %s8
    %p113 = scmp.lt.s32.totalorder %s8, 3
    %p114 = pnand %p112, %p113
    %p115 = pneg %p114
    // Predicated region
    $region25: #{quadratic_forward.1} parent=5 // pred_check
      _
    $region26: #{quadratic_forward.1} parent=5 // pred_check_branch
      %117 = sbr.rel (%p114) target = $region28
    $region27: #{quadratic_forward.1} parent=5 // pred_region
      %s118 = ssub.s32 %s8, 1
      %s119 = smul.u32 32, %s13
      %p120 = scmp.lt.s32.totalorder %s119, 63
      %s121 = scalar_select %p120, %s119, 63
      %s122 = smul.addr %s121, 8
      %s123 = scalar_lea.vmem %s0, %s122
      %p124 = pneg %p34
      %p125 = pneg %p31
      %p126 = pneg %p55
      %p127 = pneg %p52
      %p128 = pneg %p81
      %p129 = pneg %p78
      %s130 = smul.u32 32, %s13
      %p131 = scmp.lt.s32.totalorder %s130, 63
      %s132 = scalar_select %p131, %s130, 63
      %s133 = smul.addr %s132, 8
      %s134 = scalar_lea.vmem %s2, %s133
      %s135 = smul.u32 32, %s13
      %p136 = scmp.lt.s32.totalorder %s135, 63
      %s137 = scalar_select %p136, %s135, 63
      %s138 = smul.addr %s137, 8
      %s139 = scalar_lea.vmem %s0, %s138
      %s140 = smul.u32 32, %s13
      %s141 = smul.u32 32, %s13
      %p142 = scmp.lt.s32.totalorder %s141, 63
      %s143 = scalar_select %p142, %s141, 63
      %s144 = smul.addr %s143, 8
      %s145 = scalar_lea.vmem %s2, %s144
      %s146 = smul.u32 32, %s13
      %v147 = vld [vmem:[%s139] sm:$0xff]
      %v148 = vld [vmem:[%s139 + $0x8] sm:$0xff]
      %v149 = vld [vmem:[%s139 + $0x10] sm:$0xff]
      %v150 = vld [vmem:[%s139 + $0x18] sm:$0xff]
      %v151 = vld [vmem:[%s139 + $0x20] sm:$0xff]
      %v152 = vld [vmem:[%s139 + $0x28] sm:$0xff]
      %v153 = vld [vmem:[%s139 + $0x30] sm:$0xff]
      %v154 = vld [vmem:[%s139 + $0x38] sm:$0xff]
      %v155 = vld [vmem:[%s139 + $0x40] sm:$0xff]
      %v156 = vld [vmem:[%s139 + $0x48] sm:$0xff]
      %v157 = vld [vmem:[%s139 + $0x50] sm:$0xff]
      %v158 = vld [vmem:[%s139 + $0x58] sm:$0xff]
      %v159 = vld [vmem:[%s139 + $0x60] sm:$0xff]
      %v160 = vld [vmem:[%s139 + $0x68] sm:$0xff]
      %v161 = vld [vmem:[%s139 + $0x70] sm:$0xff]
      %v162 = vld [vmem:[%s139 + $0x78] sm:$0xff]
      %v163 = vld [vmem:[%s139 + $0x80] sm:$0xff]
      %v164 = vld [vmem:[%s139 + $0x88] sm:$0xff]
      %v165 = vld [vmem:[%s139 + $0x90] sm:$0xff]
      %v166 = vld [vmem:[%s139 + $0x98] sm:$0xff]
      %v167 = vld [vmem:[%s139 + $0xa0] sm:$0xff]
      %v168 = vld [vmem:[%s139 + $0xa8] sm:$0xff]
      %v169 = vld [vmem:[%s139 + $0xb0] sm:$0xff]
      %v170 = vld [vmem:[%s139 + $0xb8] sm:$0xff]
      %v171 = vld [vmem:[%s139 + $0xc0] sm:$0xff]
      %v172 = vld [vmem:[%s139 + $0xc8] sm:$0xff]
      %v173 = vld [vmem:[%s139 + $0xd0] sm:$0xff]
      %v174 = vld [vmem:[%s139 + $0xd8] sm:$0xff]
      %v175 = vld [vmem:[%s139 + $0xe0] sm:$0xff]
      %v176 = vld [vmem:[%s139 + $0xe8] sm:$0xff]
      %v177 = vld [vmem:[%s139 + $0xf0] sm:$0xff]
      %v178 = vld [vmem:[%s139 + $0xf8] sm:$0xff]
      %v179 = vld [vmem:[%s1] sm:$0xff]
      %v180 = vld [vmem:[%s1 + $0x8] sm:$0xff]
      %v181 = vld [vmem:[%s1 + $0x10] sm:$0xff]
      %v182 = vld [vmem:[%s1 + $0x18] sm:$0xff]
      %vm183 = vcmask 261120
      %v185 = vsel %vm183, %v147, 0
      %v188 = vsel %vm183, %v148, 0
      %v191 = vsel %vm183, %v149, 0
      %v194 = vsel %vm183, %v150, 0
      %v197 = vsel %vm183, %v151, 0
      %v200 = vsel %vm183, %v152, 0
      %v203 = vsel %vm183, %v153, 0
      %v206 = vsel %vm183, %v154, 0
      %v209 = vsel %vm183, %v155, 0
      %v212 = vsel %vm183, %v156, 0
      %v215 = vsel %vm183, %v157, 0
      %v218 = vsel %vm183, %v158, 0
      %v221 = vsel %vm183, %v159, 0
      %v224 = vsel %vm183, %v160, 0
      %v227 = vsel %vm183, %v161, 0
      %v230 = vsel %vm183, %v162, 0
      %v233 = vsel %vm183, %v163, 0
      %v236 = vsel %vm183, %v164, 0
      %v239 = vsel %vm183, %v165, 0
      %v242 = vsel %vm183, %v166, 0
      %v245 = vsel %vm183, %v167, 0
      %v248 = vsel %vm183, %v168, 0
      %v251 = vsel %vm183, %v169, 0
      %v254 = vsel %vm183, %v170, 0
      %v257 = vsel %vm183, %v171, 0
      %v260 = vsel %vm183, %v172, 0
      %v263 = vsel %vm183, %v173, 0
      %v266 = vsel %vm183, %v174, 0
      %v269 = vsel %vm183, %v175, 0
      %v272 = vsel %vm183, %v176, 0
      %v275 = vsel %vm183, %v177, 0
      %v278 = vsel %vm183, %v178, 0
      %280 = vmatpush.msra.mxu0 0.0
      %281 = vmatpush.msra.mxu0 0.0
      %282 = vmatpush.msra.mxu0 0.0
      %283 = vmatpush.msra.mxu0 0.0
      %284 = vmatpush.msra.mxu0 0.0
      %285 = vmatpush.msra.mxu0 0.0
      %286 = vmatpush.msra.mxu0 0.0
      %287 = vmatpush.msra.mxu0 0.0
      %288 = vmatpush.msra.mxu0 0.0
      %289 = vmatpush.msra.mxu0 0.0
      %290 = vmatpush.msra.mxu0 0.0
      %291 = vmatpush.msra.mxu0 0.0
      %292 = vmatpush.msra.mxu0 %v182
      %293 = vmatpush.msra.mxu0 %v181
      %294 = vmatpush.msra.mxu0 %v180
      %295 = vmatpush.msra.mxu0 %v179
      %296 = vmatmul.f32.gmra.mxu0 %v185
      %v297 = vpop.f32.mrf.mxu0
      %v298 = vadd.f32 0.0, %v297
      %299 = vmatmul.f32.gmra.mxu0 %v188
      %v300 = vpop.f32.mrf.mxu0
      %v301 = vadd.f32 0.0, %v300
      %302 = vmatmul.f32.gmra.mxu0 %v191
      %v303 = vpop.f32.mrf.mxu0
      %v304 = vadd.f32 0.0, %v303
      %305 = vmatmul.f32.gmra.mxu0 %v194
      %v306 = vpop.f32.mrf.mxu0
      %v307 = vadd.f32 0.0, %v306
      %308 = vmatmul.f32.gmra.mxu0 %v197
      %v309 = vpop.f32.mrf.mxu0
      %v310 = vadd.f32 0.0, %v309
      %311 = vmatmul.f32.gmra.mxu0 %v200
      %v312 = vpop.f32.mrf.mxu0
      %v313 = vadd.f32 0.0, %v312
      %314 = vmatmul.f32.gmra.mxu0 %v203
      %v315 = vpop.f32.mrf.mxu0
      %v316 = vadd.f32 0.0, %v315
      %317 = vmatmul.f32.gmra.mxu0 %v206
      %v318 = vpop.f32.mrf.mxu0
      %v319 = vadd.f32 0.0, %v318
      %320 = vmatmul.f32.gmra.mxu0 %v209
      %v321 = vpop.f32.mrf.mxu0
      %v322 = vadd.f32 0.0, %v321
      %323 = vmatmul.f32.gmra.mxu0 %v212
      %v324 = vpop.f32.mrf.mxu0
      %v325 = vadd.f32 0.0, %v324
      %326 = vmatmul.f32.gmra.mxu0 %v215
      %v327 = vpop.f32.mrf.mxu0
      %v328 = vadd.f32 0.0, %v327
      %329 = vmatmul.f32.gmra.mxu0 %v218
      %v330 = vpop.f32.mrf.mxu0
      %v331 = vadd.f32 0.0, %v330
      %332 = vmatmul.f32.gmra.mxu0 %v221
      %v333 = vpop.f32.mrf.mxu0
      %v334 = vadd.f32 0.0, %v333
      %335 = vmatmul.f32.gmra.mxu0 %v224
      %v336 = vpop.f32.mrf.mxu0
      %v337 = vadd.f32 0.0, %v336
      %338 = vmatmul.f32.gmra.mxu0 %v227
      %v339 = vpop.f32.mrf.mxu0
      %v340 = vadd.f32 0.0, %v339
      %341 = vmatmul.f32.gmra.mxu0 %v230
      %v342 = vpop.f32.mrf.mxu0
      %v343 = vadd.f32 0.0, %v342
      %344 = vmatmul.f32.gmra.mxu0 %v233
      %v345 = vpop.f32.mrf.mxu0
      %v346 = vadd.f32 0.0, %v345
      %347 = vmatmul.f32.gmra.mxu0 %v236
      %v348 = vpop.f32.mrf.mxu0
      %v349 = vadd.f32 0.0, %v348
      %350 = vmatmul.f32.gmra.mxu0 %v239
      %v351 = vpop.f32.mrf.mxu0
      %v352 = vadd.f32 0.0, %v351
      %353 = vmatmul.f32.gmra.mxu0 %v242
      %v354 = vpop.f32.mrf.mxu0
      %v355 = vadd.f32 0.0, %v354
      %356 = vmatmul.f32.gmra.mxu0 %v245
      %v357 = vpop.f32.mrf.mxu0
      %v358 = vadd.f32 0.0, %v357
      %359 = vmatmul.f32.gmra.mxu0 %v248
      %v360 = vpop.f32.mrf.mxu0
      %v361 = vadd.f32 0.0, %v360
      %362 = vmatmul.f32.gmra.mxu0 %v251
      %v363 = vpop.f32.mrf.mxu0
      %v364 = vadd.f32 0.0, %v363
      %365 = vmatmul.f32.gmra.mxu0 %v254
      %v366 = vpop.f32.mrf.mxu0
      %v367 = vadd.f32 0.0, %v366
      %368 = vmatmul.f32.gmra.mxu0 %v257
      %v369 = vpop.f32.mrf.mxu0
      %v370 = vadd.f32 0.0, %v369
      %371 = vmatmul.f32.gmra.mxu0 %v260
      %v372 = vpop.f32.mrf.mxu0
      %v373 = vadd.f32 0.0, %v372
      %374 = vmatmul.f32.gmra.mxu0 %v263
      %v375 = vpop.f32.mrf.mxu0
      %v376 = vadd.f32 0.0, %v375
      %377 = vmatmul.f32.gmra.mxu0 %v266
      %v378 = vpop.f32.mrf.mxu0
      %v379 = vadd.f32 0.0, %v378
      %380 = vmatmul.f32.gmra.mxu0 %v269
      %v381 = vpop.f32.mrf.mxu0
      %v382 = vadd.f32 0.0, %v381
      %383 = vmatmul.f32.gmra.mxu0 %v272
      %v384 = vpop.f32.mrf.mxu0
      %v385 = vadd.f32 0.0, %v384
      %386 = vmatmul.f32.gmra.mxu0 %v275
      %v387 = vpop.f32.mrf.mxu0
      %v388 = vadd.f32 0.0, %v387
      %389 = vmatmul.f32.gmra.mxu0 %v278
      %v390 = vpop.f32.mrf.mxu0
      %v391 = vadd.f32 0.0, %v390
      %392 = vdwg.mxu0
      %v394 = vsel %vm183, %v298, 0
      %396 = vmatpush.xpose.msra.mxu0 0.0
      %397 = vmatpush.xpose.msra.mxu0 0.0
      %398 = vmatpush.xpose.msra.mxu0 0.0
      %399 = vmatpush.xpose.msra.mxu0 0.0
      %400 = vmatpush.xpose.msra.mxu0 0.0
      %401 = vmatpush.xpose.msra.mxu0 0.0
      %402 = vmatpush.xpose.msra.mxu0 0.0
      %403 = vmatpush.xpose.msra.mxu0 0.0
      %404 = vmatpush.xpose.msra.mxu0 0.0
      %405 = vmatpush.xpose.msra.mxu0 0.0
      %406 = vmatpush.xpose.msra.mxu0 0.0
      %407 = vmatpush.xpose.msra.mxu0 0.0
      %408 = vmatpush.xpose.msra.mxu0 0.0
      %409 = vmatpush.xpose.msra.mxu0 0.0
      %410 = vmatpush.xpose.msra.mxu0 0.0
      %411 = vmatpush.xpose.msra.mxu0 %v185
      %412 = vmatmul.f32.gmra.mxu0 %v394
      %v413 = vpop.f32.mrf.mxu0
      %v414 = vadd.f32 0.0, %v413
      %415 = vdwg.mxu0
      %v417 = vsel %vm183, %v301, 0
      %419 = vmatpush.xpose.msra.mxu0 0.0
      %420 = vmatpush.xpose.msra.mxu0 0.0
      %421 = vmatpush.xpose.msra.mxu0 0.0
      %422 = vmatpush.xpose.msra.mxu0 0.0
      %423 = vmatpush.xpose.msra.mxu0 0.0
      %424 = vmatpush.xpose.msra.mxu0 0.0
      %425 = vmatpush.xpose.msra.mxu0 0.0
      %426 = vmatpush.xpose.msra.mxu0 0.0
      %427 = vmatpush.xpose.msra.mxu0 0.0
      %428 = vmatpush.xpose.msra.mxu0 0.0
      %429 = vmatpush.xpose.msra.mxu0 0.0
      %430 = vmatpush.xpose.msra.mxu0 0.0
      %431 = vmatpush.xpose.msra.mxu0 0.0
      %432 = vmatpush.xpose.msra.mxu0 0.0
      %433 = vmatpush.xpose.msra.mxu0 0.0
      %434 = vmatpush.xpose.msra.mxu0 %v188
      %435 = vmatmul.f32.gmra.mxu0 %v417
      %v436 = vpop.f32.mrf.mxu0
      %v437 = vadd.f32 0.0, %v436
      %438 = vdwg.mxu0
      %v440 = vsel %vm183, %v304, 0
      %442 = vmatpush.xpose.msra.mxu0 0.0
      %443 = vmatpush.xpose.msra.mxu0 0.0
      %444 = vmatpush.xpose.msra.mxu0 0.0
      %445 = vmatpush.xpose.msra.mxu0 0.0
      %446 = vmatpush.xpose.msra.mxu0 0.0
      %447 = vmatpush.xpose.msra.mxu0 0.0
      %448 = vmatpush.xpose.msra.mxu0 0.0
      %449 = vmatpush.xpose.msra.mxu0 0.0
      %450 = vmatpush.xpose.msra.mxu0 0.0
      %451 = vmatpush.xpose.msra.mxu0 0.0
      %452 = vmatpush.xpose.msra.mxu0 0.0
      %453 = vmatpush.xpose.msra.mxu0 0.0
      %454 = vmatpush.xpose.msra.mxu0 0.0
      %455 = vmatpush.xpose.msra.mxu0 0.0
      %456 = vmatpush.xpose.msra.mxu0 0.0
      %457 = vmatpush.xpose.msra.mxu0 %v191
      %458 = vmatmul.f32.gmra.mxu0 %v440
      %v459 = vpop.f32.mrf.mxu0
      %v460 = vadd.f32 0.0, %v459
      %461 = vdwg.mxu0
      %v463 = vsel %vm183, %v307, 0
      %465 = vmatpush.xpose.msra.mxu0 0.0
      %466 = vmatpush.xpose.msra.mxu0 0.0
      %467 = vmatpush.xpose.msra.mxu0 0.0
      %468 = vmatpush.xpose.msra.mxu0 0.0
      %469 = vmatpush.xpose.msra.mxu0 0.0
      %470 = vmatpush.xpose.msra.mxu0 0.0
      %471 = vmatpush.xpose.msra.mxu0 0.0
      %472 = vmatpush.xpose.msra.mxu0 0.0
      %473 = vmatpush.xpose.msra.mxu0 0.0
      %474 = vmatpush.xpose.msra.mxu0 0.0
      %475 = vmatpush.xpose.msra.mxu0 0.0
      %476 = vmatpush.xpose.msra.mxu0 0.0
      %477 = vmatpush.xpose.msra.mxu0 0.0
      %478 = vmatpush.xpose.msra.mxu0 0.0
      %479 = vmatpush.xpose.msra.mxu0 0.0
      %480 = vmatpush.xpose.msra.mxu0 %v194
      %481 = vmatmul.f32.gmra.mxu0 %v463
      %v482 = vpop.f32.mrf.mxu0
      %v483 = vadd.f32 0.0, %v482
      %484 = vdwg.mxu0
      %v486 = vsel %vm183, %v310, 0
      %488 = vmatpush.xpose.msra.mxu0 0.0
      %489 = vmatpush.xpose.msra.mxu0 0.0
      %490 = vmatpush.xpose.msra.mxu0 0.0
      %491 = vmatpush.xpose.msra.mxu0 0.0
      %492 = vmatpush.xpose.msra.mxu0 0.0
      %493 = vmatpush.xpose.msra.mxu0 0.0
      %494 = vmatpush.xpose.msra.mxu0 0.0
      %495 = vmatpush.xpose.msra.mxu0 0.0
      %496 = vmatpush.xpose.msra.mxu0 0.0
      %497 = vmatpush.xpose.msra.mxu0 0.0
      %498 = vmatpush.xpose.msra.mxu0 0.0
      %499 = vmatpush.xpose.msra.mxu0 0.0
      %500 = vmatpush.xpose.msra.mxu0 0.0
      %501 = vmatpush.xpose.msra.mxu0 0.0
      %502 = vmatpush.xpose.msra.mxu0 0.0
      %503 = vmatpush.xpose.msra.mxu0 %v197
      %504 = vmatmul.f32.gmra.mxu0 %v486
      %v505 = vpop.f32.mrf.mxu0
      %v506 = vadd.f32 0.0, %v505
      %507 = vdwg.mxu0
      %v509 = vsel %vm183, %v313, 0
      %511 = vmatpush.xpose.msra.mxu0 0.0
      %512 = vmatpush.xpose.msra.mxu0 0.0
      %513 = vmatpush.xpose.msra.mxu0 0.0
      %514 = vmatpush.xpose.msra.mxu0 0.0
      %515 = vmatpush.xpose.msra.mxu0 0.0
      %516 = vmatpush.xpose.msra.mxu0 0.0
      %517 = vmatpush.xpose.msra.mxu0 0.0
      %518 = vmatpush.xpose.msra.mxu0 0.0
      %519 = vmatpush.xpose.msra.mxu0 0.0
      %520 = vmatpush.xpose.msra.mxu0 0.0
      %521 = vmatpush.xpose.msra.mxu0 0.0
      %522 = vmatpush.xpose.msra.mxu0 0.0
      %523 = vmatpush.xpose.msra.mxu0 0.0
      %524 = vmatpush.xpose.msra.mxu0 0.0
      %525 = vmatpush.xpose.msra.mxu0 0.0
      %526 = vmatpush.xpose.msra.mxu0 %v200
      %527 = vmatmul.f32.gmra.mxu0 %v509
      %v528 = vpop.f32.mrf.mxu0
      %v529 = vadd.f32 0.0, %v528
      %530 = vdwg.mxu0
      %v532 = vsel %vm183, %v316, 0
      %534 = vmatpush.xpose.msra.mxu0 0.0
      %535 = vmatpush.xpose.msra.mxu0 0.0
      %536 = vmatpush.xpose.msra.mxu0 0.0
      %537 = vmatpush.xpose.msra.mxu0 0.0
      %538 = vmatpush.xpose.msra.mxu0 0.0
      %539 = vmatpush.xpose.msra.mxu0 0.0
      %540 = vmatpush.xpose.msra.mxu0 0.0
      %541 = vmatpush.xpose.msra.mxu0 0.0
      %542 = vmatpush.xpose.msra.mxu0 0.0
      %543 = vmatpush.xpose.msra.mxu0 0.0
      %544 = vmatpush.xpose.msra.mxu0 0.0
      %545 = vmatpush.xpose.msra.mxu0 0.0
      %546 = vmatpush.xpose.msra.mxu0 0.0
      %547 = vmatpush.xpose.msra.mxu0 0.0
      %548 = vmatpush.xpose.msra.mxu0 0.0
      %549 = vmatpush.xpose.msra.mxu0 %v203
      %550 = vmatmul.f32.gmra.mxu0 %v532
      %v551 = vpop.f32.mrf.mxu0
      %v552 = vadd.f32 0.0, %v551
      %553 = vdwg.mxu0
      %v555 = vsel %vm183, %v319, 0
      %557 = vmatpush.xpose.msra.mxu0 0.0
      %558 = vmatpush.xpose.msra.mxu0 0.0
      %559 = vmatpush.xpose.msra.mxu0 0.0
      %560 = vmatpush.xpose.msra.mxu0 0.0
      %561 = vmatpush.xpose.msra.mxu0 0.0
      %562 = vmatpush.xpose.msra.mxu0 0.0
      %563 = vmatpush.xpose.msra.mxu0 0.0
      %564 = vmatpush.xpose.msra.mxu0 0.0
      %565 = vmatpush.xpose.msra.mxu0 0.0
      %566 = vmatpush.xpose.msra.mxu0 0.0
      %567 = vmatpush.xpose.msra.mxu0 0.0
      %568 = vmatpush.xpose.msra.mxu0 0.0
      %569 = vmatpush.xpose.msra.mxu0 0.0
      %570 = vmatpush.xpose.msra.mxu0 0.0
      %571 = vmatpush.xpose.msra.mxu0 0.0
      %572 = vmatpush.xpose.msra.mxu0 %v206
      %573 = vmatmul.f32.gmra.mxu0 %v555
      %v574 = vpop.f32.mrf.mxu0
      %v575 = vadd.f32 0.0, %v574
      %576 = vdwg.mxu0
      %v578 = vsel %vm183, %v322, 0
      %580 = vmatpush.xpose.msra.mxu0 0.0
      %581 = vmatpush.xpose.msra.mxu0 0.0
      %582 = vmatpush.xpose.msra.mxu0 0.0
      %583 = vmatpush.xpose.msra.mxu0 0.0
      %584 = vmatpush.xpose.msra.mxu0 0.0
      %585 = vmatpush.xpose.msra.mxu0 0.0
      %586 = vmatpush.xpose.msra.mxu0 0.0
      %587 = vmatpush.xpose.msra.mxu0 0.0
      %588 = vmatpush.xpose.msra.mxu0 0.0
      %589 = vmatpush.xpose.msra.mxu0 0.0
      %590 = vmatpush.xpose.msra.mxu0 0.0
      %591 = vmatpush.xpose.msra.mxu0 0.0
      %592 = vmatpush.xpose.msra.mxu0 0.0
      %593 = vmatpush.xpose.msra.mxu0 0.0
      %594 = vmatpush.xpose.msra.mxu0 0.0
      %595 = vmatpush.xpose.msra.mxu0 %v209
      %596 = vmatmul.f32.gmra.mxu0 %v578
      %v597 = vpop.f32.mrf.mxu0
      %v598 = vadd.f32 0.0, %v597
      %599 = vdwg.mxu0
      %v601 = vsel %vm183, %v325, 0
      %603 = vmatpush.xpose.msra.mxu0 0.0
      %604 = vmatpush.xpose.msra.mxu0 0.0
      %605 = vmatpush.xpose.msra.mxu0 0.0
      %606 = vmatpush.xpose.msra.mxu0 0.0
      %607 = vmatpush.xpose.msra.mxu0 0.0
      %608 = vmatpush.xpose.msra.mxu0 0.0
      %609 = vmatpush.xpose.msra.mxu0 0.0
      %610 = vmatpush.xpose.msra.mxu0 0.0
      %611 = vmatpush.xpose.msra.mxu0 0.0
      %612 = vmatpush.xpose.msra.mxu0 0.0
      %613 = vmatpush.xpose.msra.mxu0 0.0
      %614 = vmatpush.xpose.msra.mxu0 0.0
      %615 = vmatpush.xpose.msra.mxu0 0.0
      %616 = vmatpush.xpose.msra.mxu0 0.0
      %617 = vmatpush.xpose.msra.mxu0 0.0
      %618 = vmatpush.xpose.msra.mxu0 %v212
      %619 = vmatmul.f32.gmra.mxu0 %v601
      %v620 = vpop.f32.mrf.mxu0
      %v621 = vadd.f32 0.0, %v620
      %622 = vdwg.mxu0
      %v624 = vsel %vm183, %v328, 0
      %626 = vmatpush.xpose.msra.mxu0 0.0
      %627 = vmatpush.xpose.msra.mxu0 0.0
      %628 = vmatpush.xpose.msra.mxu0 0.0
      %629 = vmatpush.xpose.msra.mxu0 0.0
      %630 = vmatpush.xpose.msra.mxu0 0.0
      %631 = vmatpush.xpose.msra.mxu0 0.0
      %632 = vmatpush.xpose.msra.mxu0 0.0
      %633 = vmatpush.xpose.msra.mxu0 0.0
      %634 = vmatpush.xpose.msra.mxu0 0.0
      %635 = vmatpush.xpose.msra.mxu0 0.0
      %636 = vmatpush.xpose.msra.mxu0 0.0
      %637 = vmatpush.xpose.msra.mxu0 0.0
      %638 = vmatpush.xpose.msra.mxu0 0.0
      %639 = vmatpush.xpose.msra.mxu0 0.0
      %640 = vmatpush.xpose.msra.mxu0 0.0
      %641 = vmatpush.xpose.msra.mxu0 %v215
      %642 = vmatmul.f32.gmra.mxu0 %v624
      %v643 = vpop.f32.mrf.mxu0
      %v644 = vadd.f32 0.0, %v643
      %645 = vdwg.mxu0
      %v647 = vsel %vm183, %v331, 0
      %649 = vmatpush.xpose.msra.mxu0 0.0
      %650 = vmatpush.xpose.msra.mxu0 0.0
      %651 = vmatpush.xpose.msra.mxu0 0.0
      %652 = vmatpush.xpose.msra.mxu0 0.0
      %653 = vmatpush.xpose.msra.mxu0 0.0
      %654 = vmatpush.xpose.msra.mxu0 0.0
      %655 = vmatpush.xpose.msra.mxu0 0.0
      %656 = vmatpush.xpose.msra.mxu0 0.0
      %657 = vmatpush.xpose.msra.mxu0 0.0
      %658 = vmatpush.xpose.msra.mxu0 0.0
      %659 = vmatpush.xpose.msra.mxu0 0.0
      %660 = vmatpush.xpose.msra.mxu0 0.0
      %661 = vmatpush.xpose.msra.mxu0 0.0
      %662 = vmatpush.xpose.msra.mxu0 0.0
      %663 = vmatpush.xpose.msra.mxu0 0.0
      %664 = vmatpush.xpose.msra.mxu0 %v218
      %665 = vmatmul.f32.gmra.mxu0 %v647
      %v666 = vpop.f32.mrf.mxu0
      %v667 = vadd.f32 0.0, %v666
      %668 = vdwg.mxu0
      %v670 = vsel %vm183, %v334, 0
      %672 = vmatpush.xpose.msra.mxu0 0.0
      %673 = vmatpush.xpose.msra.mxu0 0.0
      %674 = vmatpush.xpose.msra.mxu0 0.0
      %675 = vmatpush.xpose.msra.mxu0 0.0
      %676 = vmatpush.xpose.msra.mxu0 0.0
      %677 = vmatpush.xpose.msra.mxu0 0.0
      %678 = vmatpush.xpose.msra.mxu0 0.0
      %679 = vmatpush.xpose.msra.mxu0 0.0
      %680 = vmatpush.xpose.msra.mxu0 0.0
      %681 = vmatpush.xpose.msra.mxu0 0.0
      %682 = vmatpush.xpose.msra.mxu0 0.0
      %683 = vmatpush.xpose.msra.mxu0 0.0
      %684 = vmatpush.xpose.msra.mxu0 0.0
      %685 = vmatpush.xpose.msra.mxu0 0.0
      %686 = vmatpush.xpose.msra.mxu0 0.0
      %687 = vmatpush.xpose.msra.mxu0 %v221
      %688 = vmatmul.f32.gmra.mxu0 %v670
      %v689 = vpop.f32.mrf.mxu0
      %v690 = vadd.f32 0.0, %v689
      %691 = vdwg.mxu0
      %v693 = vsel %vm183, %v337, 0
      %695 = vmatpush.xpose.msra.mxu0 0.0
      %696 = vmatpush.xpose.msra.mxu0 0.0
      %697 = vmatpush.xpose.msra.mxu0 0.0
      %698 = vmatpush.xpose.msra.mxu0 0.0
      %699 = vmatpush.xpose.msra.mxu0 0.0
      %700 = vmatpush.xpose.msra.mxu0 0.0
      %701 = vmatpush.xpose.msra.mxu0 0.0
      %702 = vmatpush.xpose.msra.mxu0 0.0
      %703 = vmatpush.xpose.msra.mxu0 0.0
      %704 = vmatpush.xpose.msra.mxu0 0.0
      %705 = vmatpush.xpose.msra.mxu0 0.0
      %706 = vmatpush.xpose.msra.mxu0 0.0
      %707 = vmatpush.xpose.msra.mxu0 0.0
      %708 = vmatpush.xpose.msra.mxu0 0.0
      %709 = vmatpush.xpose.msra.mxu0 0.0
      %710 = vmatpush.xpose.msra.mxu0 %v224
      %711 = vmatmul.f32.gmra.mxu0 %v693
      %v712 = vpop.f32.mrf.mxu0
      %v713 = vadd.f32 0.0, %v712
      %714 = vdwg.mxu0
      %v716 = vsel %vm183, %v340, 0
      %718 = vmatpush.xpose.msra.mxu0 0.0
      %719 = vmatpush.xpose.msra.mxu0 0.0
      %720 = vmatpush.xpose.msra.mxu0 0.0
      %721 = vmatpush.xpose.msra.mxu0 0.0
      %722 = vmatpush.xpose.msra.mxu0 0.0
      %723 = vmatpush.xpose.msra.mxu0 0.0
      %724 = vmatpush.xpose.msra.mxu0 0.0
      %725 = vmatpush.xpose.msra.mxu0 0.0
      %726 = vmatpush.xpose.msra.mxu0 0.0
      %727 = vmatpush.xpose.msra.mxu0 0.0
      %728 = vmatpush.xpose.msra.mxu0 0.0
      %729 = vmatpush.xpose.msra.mxu0 0.0
      %730 = vmatpush.xpose.msra.mxu0 0.0
      %731 = vmatpush.xpose.msra.mxu0 0.0
      %732 = vmatpush.xpose.msra.mxu0 0.0
      %733 = vmatpush.xpose.msra.mxu0 %v227
      %734 = vmatmul.f32.gmra.mxu0 %v716
      %v735 = vpop.f32.mrf.mxu0
      %v736 = vadd.f32 0.0, %v735
      %737 = vdwg.mxu0
      %v739 = vsel %vm183, %v343, 0
      %741 = vmatpush.xpose.msra.mxu0 0.0
      %742 = vmatpush.xpose.msra.mxu0 0.0
      %743 = vmatpush.xpose.msra.mxu0 0.0
      %744 = vmatpush.xpose.msra.mxu0 0.0
      %745 = vmatpush.xpose.msra.mxu0 0.0
      %746 = vmatpush.xpose.msra.mxu0 0.0
      %747 = vmatpush.xpose.msra.mxu0 0.0
      %748 = vmatpush.xpose.msra.mxu0 0.0
      %749 = vmatpush.xpose.msra.mxu0 0.0
      %750 = vmatpush.xpose.msra.mxu0 0.0
      %751 = vmatpush.xpose.msra.mxu0 0.0
      %752 = vmatpush.xpose.msra.mxu0 0.0
      %753 = vmatpush.xpose.msra.mxu0 0.0
      %754 = vmatpush.xpose.msra.mxu0 0.0
      %755 = vmatpush.xpose.msra.mxu0 0.0
      %756 = vmatpush.xpose.msra.mxu0 %v230
      %757 = vmatmul.f32.gmra.mxu0 %v739
      %v758 = vpop.f32.mrf.mxu0
      %v759 = vadd.f32 0.0, %v758
      %760 = vdwg.mxu0
      %v762 = vsel %vm183, %v346, 0
      %764 = vmatpush.xpose.msra.mxu0 0.0
      %765 = vmatpush.xpose.msra.mxu0 0.0
      %766 = vmatpush.xpose.msra.mxu0 0.0
      %767 = vmatpush.xpose.msra.mxu0 0.0
      %768 = vmatpush.xpose.msra.mxu0 0.0
      %769 = vmatpush.xpose.msra.mxu0 0.0
      %770 = vmatpush.xpose.msra.mxu0 0.0
      %771 = vmatpush.xpose.msra.mxu0 0.0
      %772 = vmatpush.xpose.msra.mxu0 0.0
      %773 = vmatpush.xpose.msra.mxu0 0.0
      %774 = vmatpush.xpose.msra.mxu0 0.0
      %775 = vmatpush.xpose.msra.mxu0 0.0
      %776 = vmatpush.xpose.msra.mxu0 0.0
      %777 = vmatpush.xpose.msra.mxu0 0.0
      %778 = vmatpush.xpose.msra.mxu0 0.0
      %779 = vmatpush.xpose.msra.mxu0 %v233
      %780 = vmatmul.f32.gmra.mxu0 %v762
      %v781 = vpop.f32.mrf.mxu0
      %v782 = vadd.f32 0.0, %v781
      %783 = vdwg.mxu0
      %v785 = vsel %vm183, %v349, 0
      %787 = vmatpush.xpose.msra.mxu0 0.0
      %788 = vmatpush.xpose.msra.mxu0 0.0
      %789 = vmatpush.xpose.msra.mxu0 0.0
      %790 = vmatpush.xpose.msra.mxu0 0.0
      %791 = vmatpush.xpose.msra.mxu0 0.0
      %792 = vmatpush.xpose.msra.mxu0 0.0
      %793 = vmatpush.xpose.msra.mxu0 0.0
      %794 = vmatpush.xpose.msra.mxu0 0.0
      %795 = vmatpush.xpose.msra.mxu0 0.0
      %796 = vmatpush.xpose.msra.mxu0 0.0
      %797 = vmatpush.xpose.msra.mxu0 0.0
      %798 = vmatpush.xpose.msra.mxu0 0.0
      %799 = vmatpush.xpose.msra.mxu0 0.0
      %800 = vmatpush.xpose.msra.mxu0 0.0
      %801 = vmatpush.xpose.msra.mxu0 0.0
      %802 = vmatpush.xpose.msra.mxu0 %v236
      %803 = vmatmul.f32.gmra.mxu0 %v785
      %v804 = vpop.f32.mrf.mxu0
      %v805 = vadd.f32 0.0, %v804
      %806 = vdwg.mxu0
      %v808 = vsel %vm183, %v352, 0
      %810 = vmatpush.xpose.msra.mxu0 0.0
      %811 = vmatpush.xpose.msra.mxu0 0.0
      %812 = vmatpush.xpose.msra.mxu0 0.0
      %813 = vmatpush.xpose.msra.mxu0 0.0
      %814 = vmatpush.xpose.msra.mxu0 0.0
      %815 = vmatpush.xpose.msra.mxu0 0.0
      %816 = vmatpush.xpose.msra.mxu0 0.0
      %817 = vmatpush.xpose.msra.mxu0 0.0
      %818 = vmatpush.xpose.msra.mxu0 0.0
      %819 = vmatpush.xpose.msra.mxu0 0.0
      %820 = vmatpush.xpose.msra.mxu0 0.0
      %821 = vmatpush.xpose.msra.mxu0 0.0
      %822 = vmatpush.xpose.msra.mxu0 0.0
      %823 = vmatpush.xpose.msra.mxu0 0.0
      %824 = vmatpush.xpose.msra.mxu0 0.0
      %825 = vmatpush.xpose.msra.mxu0 %v239
      %826 = vmatmul.f32.gmra.mxu0 %v808
      %v827 = vpop.f32.mrf.mxu0
      %v828 = vadd.f32 0.0, %v827
      %829 = vdwg.mxu0
      %v831 = vsel %vm183, %v355, 0
      %833 = vmatpush.xpose.msra.mxu0 0.0
      %834 = vmatpush.xpose.msra.mxu0 0.0
      %835 = vmatpush.xpose.msra.mxu0 0.0
      %836 = vmatpush.xpose.msra.mxu0 0.0
      %837 = vmatpush.xpose.msra.mxu0 0.0
      %838 = vmatpush.xpose.msra.mxu0 0.0
      %839 = vmatpush.xpose.msra.mxu0 0.0
      %840 = vmatpush.xpose.msra.mxu0 0.0
      %841 = vmatpush.xpose.msra.mxu0 0.0
      %842 = vmatpush.xpose.msra.mxu0 0.0
      %843 = vmatpush.xpose.msra.mxu0 0.0
      %844 = vmatpush.xpose.msra.mxu0 0.0
      %845 = vmatpush.xpose.msra.mxu0 0.0
      %846 = vmatpush.xpose.msra.mxu0 0.0
      %847 = vmatpush.xpose.msra.mxu0 0.0
      %848 = vmatpush.xpose.msra.mxu0 %v242
      %849 = vmatmul.f32.gmra.mxu0 %v831
      %v850 = vpop.f32.mrf.mxu0
      %v851 = vadd.f32 0.0, %v850
      %852 = vdwg.mxu0
      %v854 = vsel %vm183, %v358, 0
      %856 = vmatpush.xpose.msra.mxu0 0.0
      %857 = vmatpush.xpose.msra.mxu0 0.0
      %858 = vmatpush.xpose.msra.mxu0 0.0
      %859 = vmatpush.xpose.msra.mxu0 0.0
      %860 = vmatpush.xpose.msra.mxu0 0.0
      %861 = vmatpush.xpose.msra.mxu0 0.0
      %862 = vmatpush.xpose.msra.mxu0 0.0
      %863 = vmatpush.xpose.msra.mxu0 0.0
      %864 = vmatpush.xpose.msra.mxu0 0.0
      %865 = vmatpush.xpose.msra.mxu0 0.0
      %866 = vmatpush.xpose.msra.mxu0 0.0
      %867 = vmatpush.xpose.msra.mxu0 0.0
      %868 = vmatpush.xpose.msra.mxu0 0.0
      %869 = vmatpush.xpose.msra.mxu0 0.0
      %870 = vmatpush.xpose.msra.mxu0 0.0
      %871 = vmatpush.xpose.msra.mxu0 %v245
      %872 = vmatmul.f32.gmra.mxu0 %v854
      %v873 = vpop.f32.mrf.mxu0
      %v874 = vadd.f32 0.0, %v873
      %875 = vdwg.mxu0
      %v877 = vsel %vm183, %v361, 0
      %879 = vmatpush.xpose.msra.mxu0 0.0
      %880 = vmatpush.xpose.msra.mxu0 0.0
      %881 = vmatpush.xpose.msra.mxu0 0.0
      %882 = vmatpush.xpose.msra.mxu0 0.0
      %883 = vmatpush.xpose.msra.mxu0 0.0
      %884 = vmatpush.xpose.msra.mxu0 0.0
      %885 = vmatpush.xpose.msra.mxu0 0.0
      %886 = vmatpush.xpose.msra.mxu0 0.0
      %887 = vmatpush.xpose.msra.mxu0 0.0
      %888 = vmatpush.xpose.msra.mxu0 0.0
      %889 = vmatpush.xpose.msra.mxu0 0.0
      %890 = vmatpush.xpose.msra.mxu0 0.0
      %891 = vmatpush.xpose.msra.mxu0 0.0
      %892 = vmatpush.xpose.msra.mxu0 0.0
      %893 = vmatpush.xpose.msra.mxu0 0.0
      %894 = vmatpush.xpose.msra.mxu0 %v248
      %895 = vmatmul.f32.gmra.mxu0 %v877
      %v896 = vpop.f32.mrf.mxu0
      %v897 = vadd.f32 0.0, %v896
      %898 = vdwg.mxu0
      %v900 = vsel %vm183, %v364, 0
      %902 = vmatpush.xpose.msra.mxu0 0.0
      %903 = vmatpush.xpose.msra.mxu0 0.0
      %904 = vmatpush.xpose.msra.mxu0 0.0
      %905 = vmatpush.xpose.msra.mxu0 0.0
      %906 = vmatpush.xpose.msra.mxu0 0.0
      %907 = vmatpush.xpose.msra.mxu0 0.0
      %908 = vmatpush.xpose.msra.mxu0 0.0
      %909 = vmatpush.xpose.msra.mxu0 0.0
      %910 = vmatpush.xpose.msra.mxu0 0.0
      %911 = vmatpush.xpose.msra.mxu0 0.0
      %912 = vmatpush.xpose.msra.mxu0 0.0
      %913 = vmatpush.xpose.msra.mxu0 0.0
      %914 = vmatpush.xpose.msra.mxu0 0.0
      %915 = vmatpush.xpose.msra.mxu0 0.0
      %916 = vmatpush.xpose.msra.mxu0 0.0
      %917 = vmatpush.xpose.msra.mxu0 %v251
      %918 = vmatmul.f32.gmra.mxu0 %v900
      %v919 = vpop.f32.mrf.mxu0
      %v920 = vadd.f32 0.0, %v919
      %921 = vdwg.mxu0
      %v923 = vsel %vm183, %v367, 0
      %925 = vmatpush.xpose.msra.mxu0 0.0
      %926 = vmatpush.xpose.msra.mxu0 0.0
      %927 = vmatpush.xpose.msra.mxu0 0.0
      %928 = vmatpush.xpose.msra.mxu0 0.0
      %929 = vmatpush.xpose.msra.mxu0 0.0
      %930 = vmatpush.xpose.msra.mxu0 0.0
      %931 = vmatpush.xpose.msra.mxu0 0.0
      %932 = vmatpush.xpose.msra.mxu0 0.0
      %933 = vmatpush.xpose.msra.mxu0 0.0
      %934 = vmatpush.xpose.msra.mxu0 0.0
      %935 = vmatpush.xpose.msra.mxu0 0.0
      %936 = vmatpush.xpose.msra.mxu0 0.0
      %937 = vmatpush.xpose.msra.mxu0 0.0
      %938 = vmatpush.xpose.msra.mxu0 0.0
      %939 = vmatpush.xpose.msra.mxu0 0.0
      %940 = vmatpush.xpose.msra.mxu0 %v254
      %941 = vmatmul.f32.gmra.mxu0 %v923
      %v942 = vpop.f32.mrf.mxu0
      %v943 = vadd.f32 0.0, %v942
      %944 = vdwg.mxu0
      %v946 = vsel %vm183, %v370, 0
      %948 = vmatpush.xpose.msra.mxu0 0.0
      %949 = vmatpush.xpose.msra.mxu0 0.0
      %950 = vmatpush.xpose.msra.mxu0 0.0
      %951 = vmatpush.xpose.msra.mxu0 0.0
      %952 = vmatpush.xpose.msra.mxu0 0.0
      %953 = vmatpush.xpose.msra.mxu0 0.0
      %954 = vmatpush.xpose.msra.mxu0 0.0
      %955 = vmatpush.xpose.msra.mxu0 0.0
      %956 = vmatpush.xpose.msra.mxu0 0.0
      %957 = vmatpush.xpose.msra.mxu0 0.0
      %958 = vmatpush.xpose.msra.mxu0 0.0
      %959 = vmatpush.xpose.msra.mxu0 0.0
      %960 = vmatpush.xpose.msra.mxu0 0.0
      %961 = vmatpush.xpose.msra.mxu0 0.0
      %962 = vmatpush.xpose.msra.mxu0 0.0
      %963 = vmatpush.xpose.msra.mxu0 %v257
      %964 = vmatmul.f32.gmra.mxu0 %v946
      %v965 = vpop.f32.mrf.mxu0
      %v966 = vadd.f32 0.0, %v965
      %967 = vdwg.mxu0
      %v969 = vsel %vm183, %v373, 0
      %971 = vmatpush.xpose.msra.mxu0 0.0
      %972 = vmatpush.xpose.msra.mxu0 0.0
      %973 = vmatpush.xpose.msra.mxu0 0.0
      %974 = vmatpush.xpose.msra.mxu0 0.0
      %975 = vmatpush.xpose.msra.mxu0 0.0
      %976 = vmatpush.xpose.msra.mxu0 0.0
      %977 = vmatpush.xpose.msra.mxu0 0.0
      %978 = vmatpush.xpose.msra.mxu0 0.0
      %979 = vmatpush.xpose.msra.mxu0 0.0
      %980 = vmatpush.xpose.msra.mxu0 0.0
      %981 = vmatpush.xpose.msra.mxu0 0.0
      %982 = vmatpush.xpose.msra.mxu0 0.0
      %983 = vmatpush.xpose.msra.mxu0 0.0
      %984 = vmatpush.xpose.msra.mxu0 0.0
      %985 = vmatpush.xpose.msra.mxu0 0.0
      %986 = vmatpush.xpose.msra.mxu0 %v260
      %987 = vmatmul.f32.gmra.mxu0 %v969
      %v988 = vpop.f32.mrf.mxu0
      %v989 = vadd.f32 0.0, %v988
      %990 = vdwg.mxu0
      %v992 = vsel %vm183, %v376, 0
      %994 = vmatpush.xpose.msra.mxu0 0.0
      %995 = vmatpush.xpose.msra.mxu0 0.0
      %996 = vmatpush.xpose.msra.mxu0 0.0
      %997 = vmatpush.xpose.msra.mxu0 0.0
      %998 = vmatpush.xpose.msra.mxu0 0.0
      %999 = vmatpush.xpose.msra.mxu0 0.0
      %1000 = vmatpush.xpose.msra.mxu0 0.0
      %1001 = vmatpush.xpose.msra.mxu0 0.0
      %1002 = vmatpush.xpose.msra.mxu0 0.0
      %1003 = vmatpush.xpose.msra.mxu0 0.0
      %1004 = vmatpush.xpose.msra.mxu0 0.0
      %1005 = vmatpush.xpose.msra.mxu0 0.0
      %1006 = vmatpush.xpose.msra.mxu0 0.0
      %1007 = vmatpush.xpose.msra.mxu0 0.0
      %1008 = vmatpush.xpose.msra.mxu0 0.0
      %1009 = vmatpush.xpose.msra.mxu0 %v263
      %1010 = vmatmul.f32.gmra.mxu0 %v992
      %v1011 = vpop.f32.mrf.mxu0
      %v1012 = vadd.f32 0.0, %v1011
      %1013 = vdwg.mxu0
      %v1015 = vsel %vm183, %v379, 0
      %1017 = vmatpush.xpose.msra.mxu0 0.0
      %1018 = vmatpush.xpose.msra.mxu0 0.0
      %1019 = vmatpush.xpose.msra.mxu0 0.0
      %1020 = vmatpush.xpose.msra.mxu0 0.0
      %1021 = vmatpush.xpose.msra.mxu0 0.0
      %1022 = vmatpush.xpose.msra.mxu0 0.0
      %1023 = vmatpush.xpose.msra.mxu0 0.0
      %1024 = vmatpush.xpose.msra.mxu0 0.0
      %1025 = vmatpush.xpose.msra.mxu0 0.0
      %1026 = vmatpush.xpose.msra.mxu0 0.0
      %1027 = vmatpush.xpose.msra.mxu0 0.0
      %1028 = vmatpush.xpose.msra.mxu0 0.0
      %1029 = vmatpush.xpose.msra.mxu0 0.0
      %1030 = vmatpush.xpose.msra.mxu0 0.0
      %1031 = vmatpush.xpose.msra.mxu0 0.0
      %1032 = vmatpush.xpose.msra.mxu0 %v266
      %1033 = vmatmul.f32.gmra.mxu0 %v1015
      %v1034 = vpop.f32.mrf.mxu0
      %v1035 = vadd.f32 0.0, %v1034
      %1036 = vdwg.mxu0
      %v1038 = vsel %vm183, %v382, 0
      %1040 = vmatpush.xpose.msra.mxu0 0.0
      %1041 = vmatpush.xpose.msra.mxu0 0.0
      %1042 = vmatpush.xpose.msra.mxu0 0.0
      %1043 = vmatpush.xpose.msra.mxu0 0.0
      %1044 = vmatpush.xpose.msra.mxu0 0.0
      %1045 = vmatpush.xpose.msra.mxu0 0.0
      %1046 = vmatpush.xpose.msra.mxu0 0.0
      %1047 = vmatpush.xpose.msra.mxu0 0.0
      %1048 = vmatpush.xpose.msra.mxu0 0.0
      %1049 = vmatpush.xpose.msra.mxu0 0.0
      %1050 = vmatpush.xpose.msra.mxu0 0.0
      %1051 = vmatpush.xpose.msra.mxu0 0.0
      %1052 = vmatpush.xpose.msra.mxu0 0.0
      %1053 = vmatpush.xpose.msra.mxu0 0.0
      %1054 = vmatpush.xpose.msra.mxu0 0.0
      %1055 = vmatpush.xpose.msra.mxu0 %v269
      %1056 = vmatmul.f32.gmra.mxu0 %v1038
      %v1057 = vpop.f32.mrf.mxu0
      %v1058 = vadd.f32 0.0, %v1057
      %1059 = vdwg.mxu0
      %v1061 = vsel %vm183, %v385, 0
      %1063 = vmatpush.xpose.msra.mxu0 0.0
      %1064 = vmatpush.xpose.msra.mxu0 0.0
      %1065 = vmatpush.xpose.msra.mxu0 0.0
      %1066 = vmatpush.xpose.msra.mxu0 0.0
      %1067 = vmatpush.xpose.msra.mxu0 0.0
      %1068 = vmatpush.xpose.msra.mxu0 0.0
      %1069 = vmatpush.xpose.msra.mxu0 0.0
      %1070 = vmatpush.xpose.msra.mxu0 0.0
      %1071 = vmatpush.xpose.msra.mxu0 0.0
      %1072 = vmatpush.xpose.msra.mxu0 0.0
      %1073 = vmatpush.xpose.msra.mxu0 0.0
      %1074 = vmatpush.xpose.msra.mxu0 0.0
      %1075 = vmatpush.xpose.msra.mxu0 0.0
      %1076 = vmatpush.xpose.msra.mxu0 0.0
      %1077 = vmatpush.xpose.msra.mxu0 0.0
      %1078 = vmatpush.xpose.msra.mxu0 %v272
      %1079 = vmatmul.f32.gmra.mxu0 %v1061
      %v1080 = vpop.f32.mrf.mxu0
      %v1081 = vadd.f32 0.0, %v1080
      %1082 = vdwg.mxu0
      %v1084 = vsel %vm183, %v388, 0
      %1086 = vmatpush.xpose.msra.mxu0 0.0
      %1087 = vmatpush.xpose.msra.mxu0 0.0
      %1088 = vmatpush.xpose.msra.mxu0 0.0
      %1089 = vmatpush.xpose.msra.mxu0 0.0
      %1090 = vmatpush.xpose.msra.mxu0 0.0
      %1091 = vmatpush.xpose.msra.mxu0 0.0
      %1092 = vmatpush.xpose.msra.mxu0 0.0
      %1093 = vmatpush.xpose.msra.mxu0 0.0
      %1094 = vmatpush.xpose.msra.mxu0 0.0
      %1095 = vmatpush.xpose.msra.mxu0 0.0
      %1096 = vmatpush.xpose.msra.mxu0 0.0
      %1097 = vmatpush.xpose.msra.mxu0 0.0
      %1098 = vmatpush.xpose.msra.mxu0 0.0
      %1099 = vmatpush.xpose.msra.mxu0 0.0
      %1100 = vmatpush.xpose.msra.mxu0 0.0
      %1101 = vmatpush.xpose.msra.mxu0 %v275
      %1102 = vmatmul.f32.gmra.mxu0 %v1084
      %v1103 = vpop.f32.mrf.mxu0
      %v1104 = vadd.f32 0.0, %v1103
      %1105 = vdwg.mxu0
      %v1107 = vsel %vm183, %v391, 0
      %1109 = vmatpush.xpose.msra.mxu0 0.0
      %1110 = vmatpush.xpose.msra.mxu0 0.0
      %1111 = vmatpush.xpose.msra.mxu0 0.0
      %1112 = vmatpush.xpose.msra.mxu0 0.0
      %1113 = vmatpush.xpose.msra.mxu0 0.0
      %1114 = vmatpush.xpose.msra.mxu0 0.0
      %1115 = vmatpush.xpose.msra.mxu0 0.0
      %1116 = vmatpush.xpose.msra.mxu0 0.0
      %1117 = vmatpush.xpose.msra.mxu0 0.0
      %1118 = vmatpush.xpose.msra.mxu0 0.0
      %1119 = vmatpush.xpose.msra.mxu0 0.0
      %1120 = vmatpush.xpose.msra.mxu0 0.0
      %1121 = vmatpush.xpose.msra.mxu0 0.0
      %1122 = vmatpush.xpose.msra.mxu0 0.0
      %1123 = vmatpush.xpose.msra.mxu0 0.0
      %1124 = vmatpush.xpose.msra.mxu0 %v278
      %1125 = vmatmul.f32.gmra.mxu0 %v1107
      %v1126 = vpop.f32.mrf.mxu0
      %v1127 = vadd.f32 0.0, %v1126
      %1128 = vdwg.mxu0
      %vm1129 = vcmask 64512
      %1130 = vst.msk [vmem:[%s145] sm:$0xff] %vm1129, %v414
      %1131 = vst.msk [vmem:[%s145 + $0x8] sm:$0xff] %vm1129, %v437
      %1132 = vst.msk [vmem:[%s145 + $0x10] sm:$0xff] %vm1129, %v460
      %1133 = vst.msk [vmem:[%s145 + $0x18] sm:$0xff] %vm1129, %v483
      %1134 = vst.msk [vmem:[%s145 + $0x20] sm:$0xff] %vm1129, %v506
      %1135 = vst.msk [vmem:[%s145 + $0x28] sm:$0xff] %vm1129, %v529
      %1136 = vst.msk [vmem:[%s145 + $0x30] sm:$0xff] %vm1129, %v552
      %1137 = vst.msk [vmem:[%s145 + $0x38] sm:$0xff] %vm1129, %v575
      %1138 = vst.msk [vmem:[%s145 + $0x40] sm:$0xff] %vm1129, %v598
      %1139 = vst.msk [vmem:[%s145 + $0x48] sm:$0xff] %vm1129, %v621
      %1140 = vst.msk [vmem:[%s145 + $0x50] sm:$0xff] %vm1129, %v644
      %1141 = vst.msk [vmem:[%s145 + $0x58] sm:$0xff] %vm1129, %v667
      %1142 = vst.msk [vmem:[%s145 + $0x60] sm:$0xff] %vm1129, %v690
      %1143 = vst.msk [vmem:[%s145 + $0x68] sm:$0xff] %vm1129, %v713
      %1144 = vst.msk [vmem:[%s145 + $0x70] sm:$0xff] %vm1129, %v736
      %1145 = vst.msk [vmem:[%s145 + $0x78] sm:$0xff] %vm1129, %v759
      %1146 = vst.msk [vmem:[%s145 + $0x80] sm:$0xff] %vm1129, %v782
      %1147 = vst.msk [vmem:[%s145 + $0x88] sm:$0xff] %vm1129, %v805
      %1148 = vst.msk [vmem:[%s145 + $0x90] sm:$0xff] %vm1129, %v828
      %1149 = vst.msk [vmem:[%s145 + $0x98] sm:$0xff] %vm1129, %v851
      %1150 = vst.msk [vmem:[%s145 + $0xa0] sm:$0xff] %vm1129, %v874
      %1151 = vst.msk [vmem:[%s145 + $0xa8] sm:$0xff] %vm1129, %v897
      %1152 = vst.msk [vmem:[%s145 + $0xb0] sm:$0xff] %vm1129, %v920
      %1153 = vst.msk [vmem:[%s145 + $0xb8] sm:$0xff] %vm1129, %v943
      %1154 = vst.msk [vmem:[%s145 + $0xc0] sm:$0xff] %vm1129, %v966
      %1155 = vst.msk [vmem:[%s145 + $0xc8] sm:$0xff] %vm1129, %v989
      %1156 = vst.msk [vmem:[%s145 + $0xd0] sm:$0xff] %vm1129, %v1012
      %1157 = vst.msk [vmem:[%s145 + $0xd8] sm:$0xff] %vm1129, %v1035
      %1158 = vst.msk [vmem:[%s145 + $0xe0] sm:$0xff] %vm1129, %v1058
      %1159 = vst.msk [vmem:[%s145 + $0xe8] sm:$0xff] %vm1129, %v1081
      %1160 = vst.msk [vmem:[%s145 + $0xf0] sm:$0xff] %vm1129, %v1104
      %1161 = vst.msk [vmem:[%s145 + $0xf8] sm:$0xff] %vm1129, %v1127
      %s1162 = smul.u32 32, %s13
      %p1163 = scmp.lt.s32.totalorder %s1162, 63
      %s1164 = scalar_select %p1163, %s1162, 63
      %s1165 = smul.addr %s1164, 8
      %s1166 = scalar_lea.vmem %s2, %s1165
      // Predicated region
      $region29: #{quadratic_forward.1} parent=27 // pred_check
        %p1167 = pneg %p78
      $region30: #{quadratic_forward.1} parent=27 // pred_check_branch
        %1169 = sbr.rel (%p1167) target = $region32
      $region31: #{quadratic_forward.1} parent=27 // pred_region
        %s1170 = smul.u32 32, %s13
      $region32: #{quadratic_forward.1} parent=27 // pred_fallthru
        _
    $region28: #{quadratic_forward.1} parent=5 // pred_fallthru
      _
    %p1171 = scmp.le.s32.totalorder 2, %s8
    // Predicated region
    $region33: #{quadratic_forward.1} parent=5 // pred_check
      %p1172 = pneg %p1171
    $region34: #{quadratic_forward.1} parent=5 // pred_check_branch
      %1174 = sbr.rel (%p1172) target = $region36
    $region35: #{quadratic_forward.1} parent=5 // pred_region
      %s1175 = ssub.s32 %s8, 2
      // Predicated region
      $region37: #{quadratic_forward.1} parent=35 // pred_check
        %p1176 = pneg %p84
      $region38: #{quadratic_forward.1} parent=35 // pred_check_branch
        %1178 = sbr.rel (%p1176) target = $region40
      $region39: #{quadratic_forward.1} parent=35 // pred_region
        %s1179 = smul.u32 32, %s14
        %p1180 = scmp.lt.s32.totalorder %s1179, 63
        %s1181 = scalar_select %p1180, %s1179, 63
        %s1182 = smul.addr %s1181, 8
        %s1183 = scalar_lea.vmem %s2, %s1182
      $region40: #{quadratic_forward.1} parent=35 // pred_fallthru
        _
    $region36: #{quadratic_forward.1} parent=5 // pred_fallthru
      _
  $region6: #{quadratic_forward.1} parent=0 // loop_footer
    %s12 = sadd.s32 1, %s8
  $region7: #{quadratic_forward.1} parent=0 // loop_footer_branch
    %7 = sbr.rel target = $region3
  $region8: #{quadratic_forward.1} parent=0 // loop_exit
    _

</llo_original>
